<compile_context>
chip_gen: v5e
topology: v5e:2x2
jax: 0.10.0
libtpu: 0.0.40
codegen_flags: <defaults>
</compile_context>

<pallas_src>
import functools

import jax
import jax.numpy as jnp
from jax import lax
from jax.experimental import pallas as pl
from jax.experimental.pallas import tpu as pltpu


def _ce_kernel(logits_ref, labels_ref, out_ref, m_sc, l_sc, tgt_sc, *, c_rem):
    """Online (flash-style) cross-entropy over C tiles for one row tile.

    c_rem: static number of valid lanes in the last C tile (0 => all tiles full,
    masking statically elided everywhere).
    """
    ci = pl.program_id(1)
    nc = pl.num_programs(1)

    @pl.when(ci == 0)
    def _init():
        m_sc[...] = jnp.full_like(m_sc, -jnp.inf)   # running max
        l_sc[...] = jnp.zeros_like(l_sc)            # running sum of exp(x - m)
        tgt_sc[...] = jnp.zeros_like(tgt_sc)        # raw target logit

    x = logits_ref[...].astype(jnp.float32)         # (TN, TC); single upcast (bf16 ok)
    tn, tc = x.shape
    labels = labels_ref[...]                        # (TN, 1) int32
    labels_local = labels - ci * tc                 # shift the scalar side, not the tile
    col = lax.broadcasted_iota(jnp.int32, (tn, tc), 1)   # static lane iota (no +ci*tc)

    # Target-logit gather: one select + lane reduction (XLU slot).  Labels that are
    # negative (ignore_index) or belong to another C tile never match any lane.
    tgt_sc[...] += jnp.sum(jnp.where(col == labels_local, x, 0.0),
                           axis=-1, keepdims=True)

    def _online_lse(xv):
        tile_max = jnp.max(xv, axis=-1, keepdims=True)
        m_new = jnp.maximum(m_sc[...], tile_max)
        alpha = jnp.exp(m_sc[...] - m_new)
        p = jnp.exp(xv - m_new)                     # masked lanes -> exp(-inf) = 0
        l_sc[...] = alpha * l_sc[...] + jnp.sum(p, axis=-1, keepdims=True)
        m_sc[...] = m_new

    if c_rem == 0:
        # C divides evenly into tiles: no padded lanes anywhere -> no masking at all.
        _online_lse(x)
    else:
        # Only the last C tile is ragged: interior tiles take the unmasked fast path.
        @pl.when(ci < nc - 1)
        def _interior():
            _online_lse(x)

        @pl.when(ci == nc - 1)
        def _tail():
            _online_lse(jnp.where(col < c_rem, x, -jnp.inf))

    @pl.when(ci == nc - 1)
    def _finalize():
        lse = m_sc[...] + jnp.log(l_sc[...])
        # Any negative label (covers torch's default ignore_index=-100) contributes 0.
        # Padded rows of the last N tile (n % TN != 0) may contain garbage, but their
        # outputs are clipped on writeback and never reach the mean.
        out_ref[...] = jnp.where(labels >= 0, lse - tgt_sc[...], 0.0)


def _round_up(x: int, m: int) -> int:
    return -(-x // m) * m


def cross_entropy_loss(cls_output: jax.Array, label: jax.Array) -> jax.Array:
    """cls_output: (N, C) float logits; label: (N,) int class indices. Returns scalar."""
    n, c = cls_output.shape
    labels2d = label.astype(jnp.int32).reshape(n, 1)

    # C tile: full extent when it fits (always a legal block shape); otherwise 4096
    # (128-aligned; 8 MiB f32 @ TN=512, 16 MiB double-buffered).
    tc = c if c <= 4096 else 4096
    c_rem = c % tc  # 0 when c <= 4096 (tc == c) -> masking statically elided.

    # N tile: 8-aligned, capped at 512, and chosen so that there are >=2 N grid
    # steps whenever n > 8 (keeps both v7x TensorCores busy via megacore sharding).
    if n <= 8:
        tn = n
    else:
        tn = min(512, _round_up(pl.cdiv(n, 2), 8))

    grid = (pl.cdiv(n, tn), pl.cdiv(c, tc))

    per_sample = pl.pallas_call(
        functools.partial(_ce_kernel, c_rem=c_rem),
        out_shape=jax.ShapeDtypeStruct((n, 1), jnp.float32),
        grid_spec=pltpu.PrefetchScalarGridSpec(
            num_scalar_prefetch=0,
            grid=grid,
            in_specs=[
                pl.BlockSpec((tn, tc), lambda ni, ci: (ni, ci)),   # logits tile
                pl.BlockSpec((tn, 1), lambda ni, ci: (ni, 0)),     # labels co-tiled
            ],
            out_specs=pl.BlockSpec((tn, 1), lambda ni, ci: (ni, 0)),
            scratch_shapes=[
                pltpu.VMEM((tn, 1), jnp.float32),   # running max m
                pltpu.VMEM((tn, 1), jnp.float32),   # running exp-sum l
                pltpu.VMEM((tn, 1), jnp.float32),   # target logit
            ],
        ),
        compiler_params=pltpu.CompilerParams(
            dimension_semantics=("parallel", "arbitrary"),
            # 2 x 8 MiB double-buffered logits tiles + scratch: raise above v5e's
            # 16 MiB default scoped VMEM; well under every generation's physical VMEM.
            vmem_limit_bytes=32 * 1024 * 1024,
        ),
    )(cls_output, labels2d)

    # Final tiny reduction in JAX: mean over non-ignored samples.
    # (If every label is ignored this is 0/0 = NaN, matching torch.)
    valid = (label >= 0).astype(jnp.float32)
    return jnp.sum(per_sample) / jnp.sum(valid)


if __name__ == "__main__":
    key = jax.random.PRNGKey(0)
    k_logits, k_labels = jax.random.split(key)

    # Small shape consistent with the module's forward (batch of class logits).
    N, C = 8, 32
    cls_output = jax.random.normal(k_logits, (N, C), dtype=jnp.float32)
    label = jax.random.randint(k_labels, (N,), 0, C, dtype=jnp.int32)

    loss = cross_entropy_loss(cls_output, label)
    jax.block_until_ready(loss)

    logp = jax.nn.log_softmax(cls_output, axis=-1)
    ref = -jnp.mean(logp[jnp.arange(N), label])
    assert jnp.allclose(loss, ref, atol=1e-5, rtol=1e-5), (loss, ref)

    # Larger case: exercises multi-tile N (>=2 steps), C-tiling with a ragged tail
    # (masked last C tile only), and ignore_index handling.
    N2, C2 = 600, 4100
    k1, k2 = jax.random.split(jax.random.PRNGKey(1))
    logits2 = jax.random.normal(k1, (N2, C2), dtype=jnp.float32)
    label2 = jax.random.randint(k2, (N2,), 0, C2, dtype=jnp.int32)
    label2 = label2.at[0].set(-100)   # torch's default ignore_index

    loss2 = cross_entropy_loss(logits2, label2)
    jax.block_until_ready(loss2)

    logp2 = jax.nn.log_softmax(logits2, axis=-1)
    per2 = -logp2[jnp.arange(N2), jnp.clip(label2, 0, C2 - 1)]
    valid2 = (label2 >= 0).astype(jnp.float32)
    ref2 = jnp.sum(per2 * valid2) / jnp.sum(valid2)
    assert jnp.allclose(loss2, ref2, atol=1e-4, rtol=1e-5), (loss2, ref2)

    print("KERNEL_OK")
</pallas_src>

<mosaic_0001>
module attributes {stable_mosaic.version = 11 : i64} {
  func.func @_ce_kernel(%arg0: i32, %arg1: i32, %arg2: memref<8x32xf32, #tpu.memory_space<vmem>>, %arg3: memref<8x1xi32, #tpu.memory_space<vmem>>, %arg4: memref<8x1xf32, #tpu.memory_space<vmem>>, %arg5: memref<8x1xf32, #tpu.memory_space<vmem>>, %arg6: memref<8x1xf32, #tpu.memory_space<vmem>>, %arg7: memref<8x1xf32, #tpu.memory_space<vmem>>) attributes {dimension_semantics = [#tpu.dimension_semantics<parallel>, #tpu.dimension_semantics<arbitrary>], iteration_bounds = array<i64: 1, 1>, scalar_prefetch = 0 : i64, scratch_operands = 3 : i64, tpu.core_type = #tpu.core_type<tc>, window_params = [{transform_indices = @transform_0, window_bounds = array<i64: 8, 32>}, {transform_indices = @transform_1, window_bounds = array<i64: 8, 1>}, {transform_indices = @transform_2, window_bounds = array<i64: 8, 1>}]} {
    %c0_i32 = arith.constant 0 : i32
    %0 = arith.cmpi eq, %arg1, %c0_i32 : i32
    %1 = arith.extui %0 : i1 to i32
    %c0_i32_0 = arith.constant 0 : i32
    %2 = arith.cmpi ne, %1, %c0_i32_0 : i32
    scf.if %2 {
      %cst_23 = arith.constant 0xFF800000 : f32
      %38 = vector.broadcast %cst_23 : f32 to vector<8x1xf32>
      %c0_24 = arith.constant 0 : index
      %c0_25 = arith.constant 0 : index
      %39 = vector.load %arg5[%c0_24, %c0_25] : memref<8x1xf32, #tpu.memory_space<vmem>>, vector<8x1xf32>
      tpu.vector_store %arg5[%c0_24, %c0_25], %38 {strides = array<i32>} : memref<8x1xf32, #tpu.memory_space<vmem>>, vector<8x1xf32>,
      %cst_26 = arith.constant 0.000000e+00 : f32
      %40 = vector.broadcast %cst_26 : f32 to vector<8x1xf32>
      %c0_27 = arith.constant 0 : index
      %c0_28 = arith.constant 0 : index
      %41 = vector.load %arg6[%c0_27, %c0_28] : memref<8x1xf32, #tpu.memory_space<vmem>>, vector<8x1xf32>
      tpu.vector_store %arg6[%c0_27, %c0_28], %40 {strides = array<i32>} : memref<8x1xf32, #tpu.memory_space<vmem>>, vector<8x1xf32>,
      %cst_29 = arith.constant 0.000000e+00 : f32
      %42 = vector.broadcast %cst_29 : f32 to vector<8x1xf32>
      %c0_30 = arith.constant 0 : index
      %c0_31 = arith.constant 0 : index
      %43 = vector.load %arg7[%c0_30, %c0_31] : memref<8x1xf32, #tpu.memory_space<vmem>>, vector<8x1xf32>
      tpu.vector_store %arg7[%c0_30, %c0_31], %42 {strides = array<i32>} : memref<8x1xf32, #tpu.memory_space<vmem>>, vector<8x1xf32>,
    } else {
    }
    %c0 = arith.constant 0 : index
    %c0_1 = arith.constant 0 : index
    %3 = vector.load %arg2[%c0, %c0_1] : memref<8x32xf32, #tpu.memory_space<vmem>>, vector<8x32xf32>
    %c0_2 = arith.constant 0 : index
    %c0_3 = arith.constant 0 : index
    %4 = vector.load %arg3[%c0_2, %c0_3] : memref<8x1xi32, #tpu.memory_space<vmem>>, vector<8x1xi32>
    %c32_i32 = arith.constant 32 : i32
    %5 = arith.muli %arg1, %c32_i32 : i32
    %6 = vector.broadcast %5 : i32 to vector<8x1xi32>
    %7 = arith.subi %4, %6 : vector<8x1xi32>
    %8 = tpu.iota {dimensions = array<i32: 1>} : vector<8x32xi32>
    %c0_4 = arith.constant 0 : index
    %c0_5 = arith.constant 0 : index
    %9 = vector.load %arg7[%c0_4, %c0_5] : memref<8x1xf32, #tpu.memory_space<vmem>>, vector<8x1xf32>
    %10 = vector.broadcast %7 : vector<8x1xi32> to vector<8x32xi32>
    %11 = arith.cmpi eq, %8, %10 : vector<8x32xi32>
    %cst = arith.constant 0.000000e+00 : f32
    %12 = vector.broadcast %cst : f32 to vector<8x32xf32>
    %13 = arith.select %11, %3, %12 : vector<8x32xi1>, vector<8x32xf32>
    %cst_6 = arith.constant dense<0.000000e+00> : vector<8xf32>
    %14 = vector.multi_reduction <add>, %13, %cst_6 [1] : vector<8x32xf32> to vector<8xf32>
    %15 = vector.shape_cast %14 : vector<8xf32> to vector<8x1xf32>
    %16 = arith.addf %9, %15 : vector<8x1xf32>
    %c0_7 = arith.constant 0 : index
    %c0_8 = arith.constant 0 : index
    %17 = vector.load %arg7[%c0_7, %c0_8] : memref<8x1xf32, #tpu.memory_space<vmem>>, vector<8x1xf32>
    tpu.vector_store %arg7[%c0_7, %c0_8], %16 {strides = array<i32>} : memref<8x1xf32, #tpu.memory_space<vmem>>, vector<8x1xf32>,
    %cst_9 = arith.constant dense<0xFF800000> : vector<8xf32>
    %18 = vector.multi_reduction <maximumf>, %3, %cst_9 [1] : vector<8x32xf32> to vector<8xf32>
    %19 = vector.shape_cast %18 : vector<8xf32> to vector<8x1xf32>
    %c0_10 = arith.constant 0 : index
    %c0_11 = arith.constant 0 : index
    %20 = vector.load %arg5[%c0_10, %c0_11] : memref<8x1xf32, #tpu.memory_space<vmem>>, vector<8x1xf32>
    %21 = arith.maximumf %20, %19 : vector<8x1xf32>
    %c0_12 = arith.constant 0 : index
    %c0_13 = arith.constant 0 : index
    %22 = vector.load %arg5[%c0_12, %c0_13] : memref<8x1xf32, #tpu.memory_space<vmem>>, vector<8x1xf32>
    %23 = arith.subf %22, %21 : vector<8x1xf32>
    %24 = math.exp %23 : vector<8x1xf32>
    %25 = vector.broadcast %21 : vector<8x1xf32> to vector<8x32xf32>
    %26 = arith.subf %3, %25 : vector<8x32xf32>
    %27 = math.exp %26 : vector<8x32xf32>
    %c0_14 = arith.constant 0 : index
    %c0_15 = arith.constant 0 : index
    %28 = vector.load %arg6[%c0_14, %c0_15] : memref<8x1xf32, #tpu.memory_space<vmem>>, vector<8x1xf32>
    %29 = arith.mulf %24, %28 : vector<8x1xf32>
    %cst_16 = arith.constant dense<0.000000e+00> : vector<8xf32>
    %30 = vector.multi_reduction <add>, %27, %cst_16 [1] : vector<8x32xf32> to vector<8xf32>
    %31 = vector.shape_cast %30 : vector<8xf32> to vector<8x1xf32>
    %32 = arith.addf %29, %31 : vector<8x1xf32>
    %c0_17 = arith.constant 0 : index
    %c0_18 = arith.constant 0 : index
    %33 = vector.load %arg6[%c0_17, %c0_18] : memref<8x1xf32, #tpu.memory_space<vmem>>, vector<8x1xf32>
    tpu.vector_store %arg6[%c0_17, %c0_18], %32 {strides = array<i32>} : memref<8x1xf32, #tpu.memory_space<vmem>>, vector<8x1xf32>,
    %c0_19 = arith.constant 0 : index
    %c0_20 = arith.constant 0 : index
    %34 = vector.load %arg5[%c0_19, %c0_20] : memref<8x1xf32, #tpu.memory_space<vmem>>, vector<8x1xf32>
    tpu.vector_store %arg5[%c0_19, %c0_20], %21 {strides = array<i32>} : memref<8x1xf32, #tpu.memory_space<vmem>>, vector<8x1xf32>,
    %c0_i32_21 = arith.constant 0 : i32
    %35 = arith.cmpi eq, %arg1, %c0_i32_21 : i32
    %36 = arith.extui %35 : i1 to i32
    %c0_i32_22 = arith.constant 0 : i32
    %37 = arith.cmpi ne, %36, %c0_i32_22 : i32
    scf.if %37 {
      %c0_23 = arith.constant 0 : index
      %c0_24 = arith.constant 0 : index
      %38 = vector.load %arg5[%c0_23, %c0_24] : memref<8x1xf32, #tpu.memory_space<vmem>>, vector<8x1xf32>
      %c0_25 = arith.constant 0 : index
      %c0_26 = arith.constant 0 : index
      %39 = vector.load %arg6[%c0_25, %c0_26] : memref<8x1xf32, #tpu.memory_space<vmem>>, vector<8x1xf32>
      %40 = math.log %39 : vector<8x1xf32>
      %41 = arith.addf %38, %40 : vector<8x1xf32>
      %c0_i32_27 = arith.constant 0 : i32
      %42 = vector.broadcast %c0_i32_27 : i32 to vector<8x1xi32>
      %43 = arith.cmpi sge, %4, %42 : vector<8x1xi32>
      %c0_28 = arith.constant 0 : index
      %c0_29 = arith.constant 0 : index
      %44 = vector.load %arg7[%c0_28, %c0_29] : memref<8x1xf32, #tpu.memory_space<vmem>>, vector<8x1xf32>
      %45 = arith.subf %41, %44 : vector<8x1xf32>
      %cst_30 = arith.constant 0.000000e+00 : f32
      %46 = vector.broadcast %cst_30 : f32 to vector<8x1xf32>
      %47 = arith.select %43, %45, %46 : vector<8x1xi1>, vector<8x1xf32>
      %c0_31 = arith.constant 0 : index
      %c0_32 = arith.constant 0 : index
      %48 = vector.load %arg4[%c0_31, %c0_32] : memref<8x1xf32, #tpu.memory_space<vmem>>, vector<8x1xf32>
      tpu.vector_store %arg4[%c0_31, %c0_32], %47 {strides = array<i32>} : memref<8x1xf32, #tpu.memory_space<vmem>>, vector<8x1xf32>,
    } else {
    }
    return
  }
  func.func @transform_0(%arg0: i32, %arg1: i32) -> (i32, i32) {
    %c0_i32 = arith.constant 0 : i32
    return %arg0, %arg1 : i32, i32
  }
  func.func @transform_1(%arg0: i32, %arg1: i32) -> (i32, i32) {
    %c0_i32 = arith.constant 0 : i32
    %c0_i32_0 = arith.constant 0 : i32
    return %arg0, %c0_i32 : i32, i32
  }
  func.func @transform_2(%arg0: i32, %arg1: i32) -> (i32, i32) {
    %c0_i32 = arith.constant 0 : i32
    %c0_i32_0 = arith.constant 0 : i32
    return %arg0, %c0_i32 : i32, i32
  }
}

</mosaic_0001>

<llo_original>
// kernel: tpu_custom_call.1
$region0: #{tpu_custom_call.1}
  #allocation0 [shape = 'u32[]', space=smem, size = 0x4, offset = 0x4, fixed_abs, tag = 'smem constant byte address 0x4 - core index']
  #allocation1 [shape = 'u32[72,128]{1,0:T(1,128)}', space=vmem, size = 0x9000, scoped, tag = 'internal scratch']
  #allocation2 [shape = 'f32[8,1]{1,0:T(8,128)}', space=vmem, size = 0x1000, scoped, tag = 'scratch operand']
  #allocation3 [shape = 'f32[8,1]{1,0:T(8,128)}', space=vmem, size = 0x1000, scoped, tag = 'scratch operand']
  #allocation4 [shape = 'f32[8,1]{1,0:T(8,128)}', space=vmem, size = 0x1000, scoped, tag = 'scratch operand']
  %s0 = inlined_call_operand.vmem [shape: f32[8,32], index: 0, kind: input, shape index: {}]
  %s1 = inlined_call_operand.vmem [shape: s32[8,1], index: 1, kind: input, shape index: {}]
  %s2 = inlined_call_operand.vmem [shape: f32[8,1], index: 2, kind: output, shape index: {}]
  %s3 = sld [smem:[#allocation0]]
  $region26: #{tpu_custom_call.1} parent=0
    _
  %s5 = ssub.s32 1, %s3
  %s6 = scalar_select 0, %s5, %s3
  // Predicated region
  $region2: #{tpu_custom_call.1} parent=0 // pred_check
    _
  $region3: #{tpu_custom_call.1} parent=0 // pred_check_branch
    %8 = sbr.rel (0) target = $region5
  $region4: #{tpu_custom_call.1} parent=0 // pred_region
    _
  $region5: #{tpu_custom_call.1} parent=0 // pred_fallthru
    _
  // Predicated region
  $region6: #{tpu_custom_call.1} parent=0 // pred_check
    _
  $region7: #{tpu_custom_call.1} parent=0 // pred_check_branch
    %10 = sbr.rel (0) target = $region9
  $region8: #{tpu_custom_call.1} parent=0 // pred_region
    _
  $region9: #{tpu_custom_call.1} parent=0 // pred_fallthru
    _
  %p11 = scmp.eq.s32.totalorder 0, 0
  // Predicated region
  $region10: #{tpu_custom_call.1} parent=0 // pred_check
    %p12 = pneg %p11
  $region11: #{tpu_custom_call.1} parent=0 // pred_check_branch
    %14 = sbr.rel (%p12) target = $region13
  $region12: #{tpu_custom_call.1} parent=0 // pred_region
    %vm15 = vcmask 7168
    %16 = vst.msk [vmem:[#allocation2] sm:$0xff] %vm15, -inf
    %17 = vst.msk [vmem:[#allocation3] sm:$0xff] %vm15, 0.0
    %18 = vst.msk [vmem:[#allocation4] sm:$0xff] %vm15, 0.0
  $region13: #{tpu_custom_call.1} parent=0 // pred_fallthru
    _
  %v19 = vld [vmem:[%s0] sm:$0xff]
  %v20 = vld [vmem:[%s1] sm:$0xff]
  %s21 = smul.u32 0, 32
  %v22 = vstv %s21
  %v23 = vsub.s32 %v20, %v22
  %v24 = vlaneseq
  %v25 = vand.u32 %v24, 127
  %v26 = vld [vmem:[#allocation4] sm:$0xff]
  %27 = vset.pattern.permute.xlu0 0
  %28 = vperm.xlu0 %27, %v23
  %v29 = vpop.permute.xlu0 %28
  %vm30 = vcmp.eq.s32.totalorder %v25, %v29
  %v31 = vsel %vm30, %v19, 0.0
  %vm32 = vcmask 261120
  %v33 = vsel %vm32, %v31, 0.0
  %34 = vadd.xlane.f32.xlu0 %v33
  %v35 = vpop.xlane.xlu0 %34
  %v36 = vadd.f32 %v26, %v35
  %vm37 = vcmask 7168
  %38 = vst.msk [vmem:[#allocation4] sm:$0xff] %vm37, %v36
  %v39 = vsel %vm32, %v19, -inf
  %40 = vmax.xlane.f32.xlu0 %v39
  %v41 = vpop.xlane.xlu0 %40
  %v42 = vld [vmem:[#allocation2] sm:$0xff]
  %v43 = vmax.f32 %v42, %v41
  %v44 = vsub.f32 %v42, %v43
  %v45 = vmul.f32 %v44, 1.442695
  %v46 = vpow.pop %v45
  %48 = vset.pattern.permute.xlu0 0
  %49 = vperm.xlu0 %48, %v43
  %v50 = vpop.permute.xlu0 %49
  %v52 = vsub.f32 %v19, %v50
  %v53 = vmul.f32 %v52, 1.442695
  %v54 = vpow.pop %v53
  %v55 = vld [vmem:[#allocation3] sm:$0xff]
  %v56 = vmul.f32 %v46, %v55
  %v57 = vsel %vm32, %v54, 0.0
  %58 = vadd.xlane.f32.xlu0 %v57
  %v59 = vpop.xlane.xlu0 %58
  %v60 = vadd.f32 %v56, %v59
  %61 = vst.msk [vmem:[#allocation3] sm:$0xff] %vm37, %v60
  %62 = vst.msk [vmem:[#allocation2] sm:$0xff] %vm37, %v43
  // Predicated region
  $region14: #{tpu_custom_call.1} parent=0 // pred_check
    %p63 = pneg %p11
  $region15: #{tpu_custom_call.1} parent=0 // pred_check_branch
    %65 = sbr.rel (%p63) target = $region17
  $region16: #{tpu_custom_call.1} parent=0 // pred_region
    %v66 = vld [vmem:[#allocation2] sm:$0xff]
    %v67 = vld [vmem:[#allocation3] sm:$0xff]
    %v68 = vlog2.pop %v67
    %v69 = vmul.f32 %v68, 0.6931472
    %v70 = vadd.f32 %v66, %v69
    %vm71 = vcmp.ge.s32.totalorder %v20, 0
    %v72 = vld [vmem:[#allocation4] sm:$0xff]
    %v73 = vsub.f32 %v70, %v72
    %v74 = vsel %vm71, %v73, 0.0
    %75 = vst.msk [vmem:[%s2] sm:$0xff] %vm37, %v74
  $region17: #{tpu_custom_call.1} parent=0 // pred_fallthru
    _
  // Predicated region
  $region18: #{tpu_custom_call.1} parent=0 // pred_check
    _
  $region19: #{tpu_custom_call.1} parent=0 // pred_check_branch
    %77 = sbr.rel (0) target = $region21
  $region20: #{tpu_custom_call.1} parent=0 // pred_region
    _
  $region21: #{tpu_custom_call.1} parent=0 // pred_fallthru
    _
  // Predicated region
  $region22: #{tpu_custom_call.1} parent=0 // pred_check
    _
  $region23: #{tpu_custom_call.1} parent=0 // pred_check_branch
    %79 = sbr.rel (0) target = $region25
  $region24: #{tpu_custom_call.1} parent=0 // pred_region
    _
  $region25: #{tpu_custom_call.1} parent=0 // pred_fallthru
    _

</llo_original>
